<compile_context>
chip_gen: v6e
topology: v6e:2x2x1
jax: 0.10.0
libtpu: 0.0.40
codegen_flags: <defaults>
</compile_context>

<pallas_src>
import functools

import jax
import jax.numpy as jnp
from jax.experimental import pallas as pl
from jax.experimental.pallas import tpu as pltpu

_LANES = 128
_SUBLANES = 8


def _round_up(x, m):
    return (x + m - 1) // m * m


def _cdiv(a, b):
    return (a + b - 1) // b


def _tensorcores_per_device():
    """2 on dual-TC chips (v4/v5p megacore, v7x); 1 on v5e/v6e (or unknown)."""
    try:
        kind = jax.devices()[0].device_kind.lower()
    except Exception:
        return 1
    if "lite" in kind or "v5e" in kind or "v6e" in kind or "v6 lite" in kind:
        return 1
    if "v4" in kind or "v5p" in kind or "v5" in kind or "v7" in kind or "7x" in kind:
        return 2
    return 1


def _focal_loss_kernel(preds_ref, labels_ref, out_ref, *,
                       num_classes, alpha_vals, gamma):
    """preds_ref: [C, tile_r, 128]; labels_ref: [tile_r, 128] i32; out_ref: [8, 128] f32."""
    s = pl.program_id(1)

    @pl.when(s == 0)
    def _init():
        out_ref[...] = jnp.zeros_like(out_ref)

    labels = labels_ref[...]                               # [tile_r, 128] i32

    # Pass 1: row-wise max over classes.  preds_ref[c] is re-read per class
    # (VMEM-resident vector loads are cheap: 3 vld slots/cycle) instead of
    # hoisting all C casted rows, keeping live f32 temporaries small.
    m = preds_ref[0].astype(jnp.float32)
    for c in range(1, num_classes):
        m = jnp.maximum(m, preds_ref[c].astype(jnp.float32))

    # Pass 2: softmax denominator + gather-by-select of the label-class shifted
    # logit AND its exp (saves one exp per element later).  No full softmax is
    # ever materialized.
    denom = jnp.zeros_like(m)
    picked = jnp.zeros_like(m)        # shifted logit at the label class
    picked_e = jnp.zeros_like(m)      # exp(shifted) at the label class
    for c in range(num_classes):
        shifted = preds_ref[c].astype(jnp.float32) - m
        e = jnp.exp(shifted)
        denom = denom + e
        sel = labels == c
        picked = jnp.where(sel, shifted, picked)
        picked_e = jnp.where(sel, e, picked_e)

    logpt = picked - jnp.log(denom)            # log softmax at label class
    pt = picked_e / denom                      # softmax prob (no second exp)
    focal = 1.0 - pt

    g = float(gamma)
    if g == int(g) and 0 <= int(g) <= 8:       # static integer exponent -> multiply chain
        gi = int(g)
        if gi == 0:
            pow_term = jnp.ones_like(focal)
        else:
            pow_term = focal
            for _ in range(gi - 1):
                pow_term = pow_term * focal
    else:
        pow_term = jnp.power(focal, g)

    # alpha gather.  Padded rows (label = -1) and out-of-range labels -> a_t = 0
    # -> exactly zero loss (matches the previous kernel's behaviour).
    valid_f = ((labels >= 0) & (labels < num_classes)).astype(jnp.float32)
    rest = alpha_vals[1:] if num_classes > 1 else ()
    if len(set(rest)) <= 1:
        # Structured [a0, a1, a1, ...] case: 1 compare + 1 select + 1 mul.
        a1 = rest[0] if rest else alpha_vals[0]
        a_t = jnp.where(labels == 0, alpha_vals[0], a1) * valid_f
    else:
        a_t = jnp.zeros_like(m)
        for c in range(num_classes):
            a_t = jnp.where(labels == c, alpha_vals[c], a_t)
        a_t = a_t * valid_f

    loss = -(a_t * pow_term * logpt)           # [tile_r, 128]

    tile_r, lanes = loss.shape
    # Fold sublane groups with pure vreg adds; cross-lane reduce deferred to wrapper.
    out_ref[...] += jnp.sum(
        loss.reshape(tile_r // _SUBLANES, _SUBLANES, lanes), axis=0)


def focal_loss_pallas(preds, labels, *, alpha=0.25, gamma=2, num_classes=3,
                      size_average=True, preds_wire_dtype=None, tile_rows=1024):
    """preds: [B, N, C] or [B, C] float; labels: [B, N] or [B] int.

    preds_wire_dtype: optionally cast preds on the wire (e.g. jnp.bfloat16) to
    halve the dominant HBM stream; softmax math remains f32 inside the kernel.
    """
    C = preds.shape[-1]
    assert C == num_classes
    preds2d = preds.reshape(-1, C)                       # [M, C]
    if preds_wire_dtype is not None:
        preds2d = preds2d.astype(preds_wire_dtype)
    labels1d = labels.reshape(-1).astype(jnp.int32)      # [M]
    M = preds2d.shape[0]

    # alpha exactly as in __init__: [alpha, 1-alpha, 1-alpha, ...] (static floats).
    if isinstance(alpha, (list, tuple)):
        assert len(alpha) == num_classes
        alpha_vals = tuple(float(a) for a in alpha)
    else:
        assert alpha < 1
        alpha_vals = (float(alpha),) + (1.0 - float(alpha),) * (num_classes - 1)

    # --- lane-dense layout & tiling --------------------------------------
    # Dtype-aware sublane packing: f32 -> 8, bf16 -> 16, int8/fp8 -> 32.
    itemsize = jnp.dtype(preds2d.dtype).itemsize
    sub_mult = max(_SUBLANES, (_SUBLANES * 4) // max(1, itemsize))

    mr = _cdiv(M, _LANES)                                # number of 128-wide row groups
    tile_r = _round_up(min(int(tile_rows), _round_up(mr, sub_mult)), sub_mult)
    num_tiles = _cdiv(mr, tile_r)
    P = _tensorcores_per_device() if num_tiles >= 2 else 1   # megacore split only if >1 TC
    S = _cdiv(num_tiles, P)                              # sequential steps per chunk
    mr_pad = P * S * tile_r
    m_pad = mr_pad * _LANES
    pad = m_pad - M

    # Single fused relayout expression (transpose + pad + reshape) so XLA emits
    # one copy over preds.  Padded rows get label = -1 -> exactly zero loss.
    preds_cm = jnp.pad(preds2d.T, ((0, 0), (0, pad))).reshape(C, mr_pad, _LANES)
    labels_rm = jnp.pad(labels1d, ((0, pad),),
                        constant_values=-1).reshape(mr_pad, _LANES)

    kernel = functools.partial(_focal_loss_kernel, num_classes=C,
                               alpha_vals=alpha_vals, gamma=float(gamma))

    # VMEM at tile_r=1024 (f32 wire): preds 1.5 MiB + labels 0.5 MiB, double
    # buffered, plus a handful of full-tile f32 temporaries -> well under the
    # explicit 32 MiB limit (raised above the v5e 16 MiB scoped default).
    partials = pl.pallas_call(
        kernel,
        out_shape=jax.ShapeDtypeStruct((P * _SUBLANES, _LANES), jnp.float32),
        grid=(P, S),
        in_specs=[
            pl.BlockSpec((C, tile_r, _LANES), lambda p, s: (0, p * S + s, 0)),
            pl.BlockSpec((tile_r, _LANES), lambda p, s: (p * S + s, 0)),
        ],
        out_specs=pl.BlockSpec((_SUBLANES, _LANES), lambda p, s: (p, 0)),
        compiler_params=pltpu.CompilerParams(
            dimension_semantics=("parallel", "arbitrary"),
            vmem_limit_bytes=32 * 1024 * 1024),
    )(preds_cm, labels_rm)

    total = jnp.sum(partials)                            # tiny final reduce in XLA
    if size_average:
        return total / jnp.float32(M)                    # divide by TRUE M, not padded
    return total


def _focal_loss_ref(preds, labels, *, alpha=0.25, gamma=2, num_classes=3,
                    size_average=True):
    """Pure-JAX reference (mirrors the PyTorch forward)."""
    C = preds.shape[-1]
    p2 = preds.reshape(-1, C).astype(jnp.float32)
    l2 = labels.reshape(-1).astype(jnp.int32)
    alpha_vec = jnp.concatenate([
        jnp.array([alpha], dtype=jnp.float32),
        jnp.full((num_classes - 1,), 1.0 - alpha, dtype=jnp.float32),
    ])
    sm = jax.nn.softmax(p2, axis=1)
    lsm = jnp.log(sm)
    pt = jnp.take_along_axis(sm, l2[:, None], axis=1)[:, 0]
    logpt = jnp.take_along_axis(lsm, l2[:, None], axis=1)[:, 0]
    a_t = alpha_vec[l2]
    loss = -a_t * jnp.power(1.0 - pt, float(gamma)) * logpt
    return jnp.mean(loss) if size_average else jnp.sum(loss)


if __name__ == "__main__":
    key = jax.random.PRNGKey(0)
    k1, k2 = jax.random.split(key)

    B, N, C = 2, 8, 3            # preds: [B, N, C], labels: [B, N]
    preds = jax.random.normal(k1, (B, N, C), dtype=jnp.float32)
    labels = jax.random.randint(k2, (B, N), 0, C, dtype=jnp.int32)

    # f32 path (default): matches the module forward numerically.
    out = focal_loss_pallas(preds, labels, alpha=0.25, gamma=2, num_classes=C,
                            size_average=True)
    out = jax.block_until_ready(out)
    ref = _focal_loss_ref(preds, labels, alpha=0.25, gamma=2, num_classes=C,
                          size_average=True)
    assert jnp.allclose(out, ref, rtol=1e-5, atol=1e-6), (out, ref)

    # size_average=False (sum) path.
    out_sum = focal_loss_pallas(preds, labels, alpha=0.25, gamma=2, num_classes=C,
                                size_average=False)
    ref_sum = _focal_loss_ref(preds, labels, alpha=0.25, gamma=2, num_classes=C,
                              size_average=False)
    assert jnp.allclose(jax.block_until_ready(out_sum), ref_sum,
                        rtol=1e-5, atol=1e-5), (out_sum, ref_sum)

    # Optional bf16-on-the-wire path; compared against the same math on
    # bf16-quantized logits (kernel upcasts to f32 internally, as does the ref).
    out_bf16 = focal_loss_pallas(preds, labels, alpha=0.25, gamma=2, num_classes=C,
                                 size_average=True, preds_wire_dtype=jnp.bfloat16)
    out_bf16 = jax.block_until_ready(out_bf16)
    ref_bf16 = _focal_loss_ref(preds.astype(jnp.bfloat16), labels,
                               alpha=0.25, gamma=2, num_classes=C,
                               size_average=True)
    assert jnp.allclose(out_bf16, ref_bf16, rtol=1e-4, atol=1e-5), (out_bf16, ref_bf16)

    print("KERNEL_OK")
</pallas_src>

<mosaic_0001>
module attributes {stable_mosaic.version = 11 : i64} {
  func.func @_focal_loss_kernel(%arg0: i32, %arg1: i32, %arg2: memref<3x8x128xf32, #tpu.memory_space<vmem>>, %arg3: memref<8x128xi32, #tpu.memory_space<vmem>>, %arg4: memref<8x128xf32, #tpu.memory_space<vmem>>) attributes {dimension_semantics = [#tpu.dimension_semantics<parallel>, #tpu.dimension_semantics<arbitrary>], iteration_bounds = array<i64: 1, 1>, scalar_prefetch = 0 : i64, scratch_operands = 0 : i64, tpu.core_type = #tpu.core_type<tc>, window_params = [{transform_indices = @transform_0, window_bounds = array<i64: 3, 8, 128>}, {transform_indices = @transform_1, window_bounds = array<i64: 8, 128>}, {transform_indices = @transform_2, window_bounds = array<i64: 8, 128>}]} {
    %c0_i32 = arith.constant 0 : i32
    %0 = arith.cmpi eq, %arg1, %c0_i32 : i32
    %1 = arith.extui %0 : i1 to i32
    %c0_i32_0 = arith.constant 0 : i32
    %2 = arith.cmpi ne, %1, %c0_i32_0 : i32
    scf.if %2 {
      %cst_32 = arith.constant 0.000000e+00 : f32
      %70 = vector.broadcast %cst_32 : f32 to vector<8x128xf32>
      %c0_33 = arith.constant 0 : index
      %c0_34 = arith.constant 0 : index
      %71 = vector.load %arg4[%c0_33, %c0_34] : memref<8x128xf32, #tpu.memory_space<vmem>>, vector<8x128xf32>
      tpu.vector_store %arg4[%c0_33, %c0_34], %70 {strides = array<i32>} : memref<8x128xf32, #tpu.memory_space<vmem>>, vector<8x128xf32>,
    } else {
    }
    %c0 = arith.constant 0 : index
    %c0_1 = arith.constant 0 : index
    %3 = vector.load %arg3[%c0, %c0_1] : memref<8x128xi32, #tpu.memory_space<vmem>>, vector<8x128xi32>
    %c0_2 = arith.constant 0 : index
    %c0_3 = arith.constant 0 : index
    %c0_4 = arith.constant 0 : index
    %4 = vector.load %arg2[%c0_2, %c0_3, %c0_4] : memref<3x8x128xf32, #tpu.memory_space<vmem>>, vector<1x8x128xf32>
    %5 = vector.shape_cast %4 : vector<1x8x128xf32> to vector<8x128xf32>
    %c1 = arith.constant 1 : index
    %c0_5 = arith.constant 0 : index
    %c0_6 = arith.constant 0 : index
    %6 = vector.load %arg2[%c1, %c0_5, %c0_6] : memref<3x8x128xf32, #tpu.memory_space<vmem>>, vector<1x8x128xf32>
    %7 = vector.shape_cast %6 : vector<1x8x128xf32> to vector<8x128xf32>
    %8 = arith.maximumf %5, %7 : vector<8x128xf32>
    %c2 = arith.constant 2 : index
    %c0_7 = arith.constant 0 : index
    %c0_8 = arith.constant 0 : index
    %9 = vector.load %arg2[%c2, %c0_7, %c0_8] : memref<3x8x128xf32, #tpu.memory_space<vmem>>, vector<1x8x128xf32>
    %10 = vector.shape_cast %9 : vector<1x8x128xf32> to vector<8x128xf32>
    %11 = arith.maximumf %8, %10 : vector<8x128xf32>
    %cst = arith.constant 0.000000e+00 : f32
    %12 = vector.broadcast %cst : f32 to vector<8x128xf32>
    %cst_9 = arith.constant 0.000000e+00 : f32
    %13 = vector.broadcast %cst_9 : f32 to vector<8x128xf32>
    %cst_10 = arith.constant 0.000000e+00 : f32
    %14 = vector.broadcast %cst_10 : f32 to vector<8x128xf32>
    %c0_11 = arith.constant 0 : index
    %c0_12 = arith.constant 0 : index
    %c0_13 = arith.constant 0 : index
    %15 = vector.load %arg2[%c0_11, %c0_12, %c0_13] : memref<3x8x128xf32, #tpu.memory_space<vmem>>, vector<1x8x128xf32>
    %16 = vector.shape_cast %15 : vector<1x8x128xf32> to vector<8x128xf32>
    %17 = arith.subf %16, %11 : vector<8x128xf32>
    %18 = math.exp %17 : vector<8x128xf32>
    %19 = arith.addf %12, %18 : vector<8x128xf32>
    %c0_i32_14 = arith.constant 0 : i32
    %20 = vector.broadcast %c0_i32_14 : i32 to vector<8x128xi32>
    %21 = arith.cmpi eq, %3, %20 : vector<8x128xi32>
    %22 = arith.select %21, %17, %13 : vector<8x128xi1>, vector<8x128xf32>
    %23 = arith.select %21, %18, %14 : vector<8x128xi1>, vector<8x128xf32>
    %c1_15 = arith.constant 1 : index
    %c0_16 = arith.constant 0 : index
    %c0_17 = arith.constant 0 : index
    %24 = vector.load %arg2[%c1_15, %c0_16, %c0_17] : memref<3x8x128xf32, #tpu.memory_space<vmem>>, vector<1x8x128xf32>
    %25 = vector.shape_cast %24 : vector<1x8x128xf32> to vector<8x128xf32>
    %26 = arith.subf %25, %11 : vector<8x128xf32>
    %27 = math.exp %26 : vector<8x128xf32>
    %28 = arith.addf %19, %27 : vector<8x128xf32>
    %c1_i32 = arith.constant 1 : i32
    %29 = vector.broadcast %c1_i32 : i32 to vector<8x128xi32>
    %30 = arith.cmpi eq, %3, %29 : vector<8x128xi32>
    %31 = arith.select %30, %26, %22 : vector<8x128xi1>, vector<8x128xf32>
    %32 = arith.select %30, %27, %23 : vector<8x128xi1>, vector<8x128xf32>
    %c2_18 = arith.constant 2 : index
    %c0_19 = arith.constant 0 : index
    %c0_20 = arith.constant 0 : index
    %33 = vector.load %arg2[%c2_18, %c0_19, %c0_20] : memref<3x8x128xf32, #tpu.memory_space<vmem>>, vector<1x8x128xf32>
    %34 = vector.shape_cast %33 : vector<1x8x128xf32> to vector<8x128xf32>
    %35 = arith.subf %34, %11 : vector<8x128xf32>
    %36 = math.exp %35 : vector<8x128xf32>
    %37 = arith.addf %28, %36 : vector<8x128xf32>
    %c2_i32 = arith.constant 2 : i32
    %38 = vector.broadcast %c2_i32 : i32 to vector<8x128xi32>
    %39 = arith.cmpi eq, %3, %38 : vector<8x128xi32>
    %40 = arith.select %39, %35, %31 : vector<8x128xi1>, vector<8x128xf32>
    %41 = arith.select %39, %36, %32 : vector<8x128xi1>, vector<8x128xf32>
    %42 = math.log %37 : vector<8x128xf32>
    %43 = arith.subf %40, %42 : vector<8x128xf32>
    %44 = arith.divf %41, %37 : vector<8x128xf32>
    %cst_21 = arith.constant 1.000000e+00 : f32
    %45 = vector.broadcast %cst_21 : f32 to vector<8x128xf32>
    %46 = arith.subf %45, %44 : vector<8x128xf32>
    %47 = arith.mulf %46, %46 : vector<8x128xf32>
    %c0_i32_22 = arith.constant 0 : i32
    %48 = vector.broadcast %c0_i32_22 : i32 to vector<8x128xi32>
    %49 = arith.cmpi sge, %3, %48 : vector<8x128xi32>
    %c3_i32 = arith.constant 3 : i32
    %50 = vector.broadcast %c3_i32 : i32 to vector<8x128xi32>
    %51 = arith.cmpi slt, %3, %50 : vector<8x128xi32>
    %52 = arith.andi %49, %51 : vector<8x128xi1>
    %53 = arith.extui %52 : vector<8x128xi1> to vector<8x128xi32>
    %54 = arith.sitofp %53 : vector<8x128xi32> to vector<8x128xf32>
    %c0_i32_23 = arith.constant 0 : i32
    %55 = vector.broadcast %c0_i32_23 : i32 to vector<8x128xi32>
    %56 = arith.cmpi eq, %3, %55 : vector<8x128xi32>
    %cst_24 = arith.constant 2.500000e-01 : f32
    %cst_25 = arith.constant 7.500000e-01 : f32
    %57 = vector.broadcast %cst_24 : f32 to vector<8x128xf32>
    %58 = vector.broadcast %cst_25 : f32 to vector<8x128xf32>
    %59 = arith.select %56, %57, %58 : vector<8x128xi1>, vector<8x128xf32>
    %60 = arith.mulf %59, %54 : vector<8x128xf32>
    %61 = arith.mulf %60, %47 : vector<8x128xf32>
    %62 = arith.mulf %61, %43 : vector<8x128xf32>
    %cst_26 = arith.constant 0.000000e+00 : f32
    %63 = vector.broadcast %cst_26 : f32 to vector<8x128xf32>
    %64 = arith.subf %63, %62 : vector<8x128xf32>
    %c0_27 = arith.constant 0 : index
    %c0_28 = arith.constant 0 : index
    %65 = vector.load %arg4[%c0_27, %c0_28] : memref<8x128xf32, #tpu.memory_space<vmem>>, vector<8x128xf32>
    %66 = vector.shape_cast %64 : vector<8x128xf32> to vector<1x8x128xf32>
    %cst_29 = arith.constant dense<0.000000e+00> : vector<8x128xf32>
    %67 = vector.multi_reduction <add>, %66, %cst_29 [0] : vector<1x8x128xf32> to vector<8x128xf32>
    %68 = arith.addf %65, %67 : vector<8x128xf32>
    %c0_30 = arith.constant 0 : index
    %c0_31 = arith.constant 0 : index
    %69 = vector.load %arg4[%c0_30, %c0_31] : memref<8x128xf32, #tpu.memory_space<vmem>>, vector<8x128xf32>
    tpu.vector_store %arg4[%c0_30, %c0_31], %68 {strides = array<i32>} : memref<8x128xf32, #tpu.memory_space<vmem>>, vector<8x128xf32>,
    return
  }
  func.func @transform_0(%arg0: i32, %arg1: i32) -> (i32, i32, i32) {
    %c1_i32 = arith.constant 1 : i32
    %0 = arith.muli %arg0, %c1_i32 : i32
    %1 = arith.addi %0, %arg1 : i32
    %c0_i32 = arith.constant 0 : i32
    %c0_i32_0 = arith.constant 0 : i32
    %c0_i32_1 = arith.constant 0 : i32
    return %c0_i32, %1, %c0_i32_0 : i32, i32, i32
  }
  func.func @transform_1(%arg0: i32, %arg1: i32) -> (i32, i32) {
    %c1_i32 = arith.constant 1 : i32
    %0 = arith.muli %arg0, %c1_i32 : i32
    %1 = arith.addi %0, %arg1 : i32
    %c0_i32 = arith.constant 0 : i32
    %c0_i32_0 = arith.constant 0 : i32
    return %1, %c0_i32 : i32, i32
  }
  func.func @transform_2(%arg0: i32, %arg1: i32) -> (i32, i32) {
    %c0_i32 = arith.constant 0 : i32
    %c0_i32_0 = arith.constant 0 : i32
    return %arg0, %c0_i32 : i32, i32
  }
}

</mosaic_0001>

<llo_original>
// kernel: tpu_custom_call.1
$region0: #{tpu_custom_call.1}
  #allocation0 [shape = 'u32[]', space=smem, size = 0x4, offset = 0x4, fixed_abs, tag = 'smem constant byte address 0x4 - core index']
  #allocation1 [shape = 'u32[144,128]{1,0:T(1,128)}', space=vmem, size = 0x12000, scoped, tag = 'internal scratch']
  %s0 = inlined_call_operand.hbm [shape: f32[3,8,128], index: 0, kind: input, shape index: {}]
  %s1 = inlined_call_operand.hbm [shape: s32[8,128], index: 1, kind: input, shape index: {}]
  %s2 = inlined_call_operand.hbm [shape: f32[8,128], index: 2, kind: output, shape index: {}]
  %s3 = sld [smem:[#allocation0]]
  $region30: #{tpu_custom_call.1} parent=0
    _
  %s5 = ssub.s32 1, %s3
  %s6 = scalar_select 0, %s5, %s3
  $region1: #{tpu_custom_call.1} parent=0
    #allocation2 [shape = 'u8[12288]{0}', space=vmem, size = 0x3000, scoped, tag = 'input window, operand 0, single buffered']
    #allocation3 [shape = 's32[1]{0}', space=sflag, size = 0x4, scoped, tag = 'scoped memory for tpu_custom_call.1']
    #allocation4 [shape = 's32[1]{0}', space=sflag, size = 0x4, scoped, tag = 'scoped memory for tpu_custom_call.1']
    #allocation5 [shape = 'u8[4096]{0}', space=vmem, size = 0x1000, scoped, tag = 'input window, operand 1, single buffered']
    #allocation6 [shape = 's32[1]{0}', space=sflag, size = 0x4, scoped, tag = 'scoped memory for tpu_custom_call.1']
    #allocation7 [shape = 'u8[4096]{0}', space=vmem, size = 0x1000, scoped, tag = 'output window, operand 0, single buffered']
    %7 = vsyncpa [#allocation3], 0
    %8 = vsyncpa [#allocation6], 0
    %9 = vsyncpa [#allocation4], 0
    // Predicated region
    $region2: #{tpu_custom_call.1} parent=1 // pred_check
      _
    $region3: #{tpu_custom_call.1} parent=1 // pred_check_branch
      %11 = sbr.rel (0) target = $region5
    $region4: #{tpu_custom_call.1} parent=1 // pred_region
      %s12 = sadd.s32 0, 0
      %s14 = ssub.s32 384, 384
      %15 = vsyncadd [#allocation3], %s14
      %s16 = smul.addr %s12, 128
      %s17 = scalar_lea.hbm %s0, %s16
      %s18 = sshll.u32 [#allocation2], 4
      %s19 = int_to_ptr.vmem [resolvable:$true] %s18
      %24 = dma.hbm_to_vmem [thread:$0]  %s17, 384, %s19, [#allocation3], 128, 128, 8
    $region5: #{tpu_custom_call.1} parent=1 // pred_fallthru
      _
    // Predicated region
    $region6: #{tpu_custom_call.1} parent=1 // pred_check
      _
    $region7: #{tpu_custom_call.1} parent=1 // pred_check_branch
      %26 = sbr.rel (0) target = $region9
    $region8: #{tpu_custom_call.1} parent=1 // pred_region
      %s27 = sadd.s32 0, 0
      %s29 = ssub.s32 128, 128
      %30 = vsyncadd [#allocation6], %s29
      %s31 = smul.addr %s27, 128
      %s32 = scalar_lea.hbm %s1, %s31
      %s34 = sshll.u32 [#allocation5], 4
      %s35 = int_to_ptr.vmem [resolvable:$true] %s34
      %37 = dma.hbm_to_vmem [thread:$0]  %s32, 128, %s35, [#allocation6]
    $region9: #{tpu_custom_call.1} parent=1 // pred_fallthru
      _
    // Predicated region
    $region10: #{tpu_custom_call.1} parent=1 // pred_check
      _
    $region11: #{tpu_custom_call.1} parent=1 // pred_check_branch
      %39 = sbr.rel (0) target = $region13
    $region12: #{tpu_custom_call.1} parent=1 // pred_region
      %40 = dma.done [#allocation3], 384
    $region13: #{tpu_custom_call.1} parent=1 // pred_fallthru
      _
    // Predicated region
    $region14: #{tpu_custom_call.1} parent=1 // pred_check
      _
    $region15: #{tpu_custom_call.1} parent=1 // pred_check_branch
      %42 = sbr.rel (0) target = $region17
    $region16: #{tpu_custom_call.1} parent=1 // pred_region
      %43 = dma.done [#allocation6], 128
    $region17: #{tpu_custom_call.1} parent=1 // pred_fallthru
      _
    %s44 = sadd.s32 0, 0
    %s45 = sadd.s32 0, 0
    %p46 = scmp.eq.s32.totalorder 0, 0
    // Predicated region
    $region18: #{tpu_custom_call.1} parent=1 // pred_check
      %p47 = pneg %p46
    $region19: #{tpu_custom_call.1} parent=1 // pred_check_branch
      %49 = sbr.rel (%p47) target = $region21
    $region20: #{tpu_custom_call.1} parent=1 // pred_region
      %50 = vst [vmem:[#allocation7] sm:$0xff] 0.0
    $region21: #{tpu_custom_call.1} parent=1 // pred_fallthru
      _
    %v51 = vld [vmem:[#allocation5] sm:$0xff]
    %v52 = vld [vmem:[#allocation2] sm:$0xff]
    %s53 = scalar_lea.vmem [#allocation2], 8
    %v54 = vld [vmem:[%s53] sm:$0xff]
    %v55 = vmax.f32 %v52, %v54
    %s56 = scalar_lea.vmem [#allocation2], 16
    %v57 = vld [vmem:[%s56] sm:$0xff]
    %v58 = vmax.f32 %v55, %v57
    %v59 = vsub.f32 %v52, %v58
    %v60 = vmul.f32 %v59, 1.442695
    %v61 = vpow.pop %v60
    %v62 = vadd.f32 %v61, 0.0
    %vm63 = vcmp.eq.s32.totalorder %v51, 0
    %v64 = vsel %vm63, %v59, 0.0
    %v65 = vsel %vm63, %v61, 0.0
    %v66 = vsub.f32 %v54, %v58
    %v67 = vmul.f32 %v66, 1.442695
    %v68 = vpow.pop %v67
    %v69 = vadd.f32 %v62, %v68
    %vm70 = vcmp.eq.s32.totalorder %v51, 1
    %v71 = vsel %vm70, %v66, %v64
    %v72 = vsel %vm70, %v68, %v65
    %v73 = vsub.f32 %v57, %v58
    %v74 = vmul.f32 %v73, 1.442695
    %v75 = vpow.pop %v74
    %v76 = vadd.f32 %v69, %v75
    %vm77 = vcmp.eq.s32.totalorder %v51, 2
    %v78 = vsel %vm77, %v73, %v71
    %v79 = vsel %vm77, %v75, %v72
    %v80 = vlog2.pop %v76
    %v81 = vmul.f32 %v80, 0.6931472
    %v82 = vsub.f32 %v78, %v81
    %v83 = vrcp.pop %v76
    %v84 = vmul.f32 %v79, %v83
    %v85 = vsub.f32 1.0, %v84
    %v86 = vmul.f32 %v85, %v85
    %vm87 = vcmp.ge.s32.totalorder %v51, 0
    %vm88 = vcmp.lt.s32.totalorder %v51, 3
    %vm89 = vmand %vm87, %vm88
    %v90 = vsel %vm89, 1, 0
    %v91 = vcvt.s32.f32 %v90
    %v92 = vsel %vm63, 0.25, 0.75
    %v93 = vmul.f32 %v92, %v91
    %v94 = vmul.f32 %v93, %v86
    %v95 = vmul.f32 %v94, %v82
    %v96 = vsub.f32 0.0, %v95
    %v97 = vld [vmem:[#allocation7] sm:$0xff]
    %v98 = vadd.f32 %v96, 0.0
    %v99 = vadd.f32 %v97, %v98
    %100 = vst [vmem:[#allocation7] sm:$0xff] %v99
    // Predicated region
    $region22: #{tpu_custom_call.1} parent=1 // pred_check
      _
    $region23: #{tpu_custom_call.1} parent=1 // pred_check_branch
      %102 = sbr.rel (0) target = $region25
    $region24: #{tpu_custom_call.1} parent=1 // pred_region
      %s104 = ssub.s32 128, 128
      %105 = vsyncadd [#allocation4], %s104
      %s107 = sshll.u32 [#allocation7], 4
      %s108 = int_to_ptr.vmem [resolvable:$true] %s107
      %110 = dma.vmem_to_hbm [thread:$0]  %s108, 128, %s2, [#allocation4]
    $region25: #{tpu_custom_call.1} parent=1 // pred_fallthru
      _
    // Predicated region
    $region26: #{tpu_custom_call.1} parent=1 // pred_check
      _
    $region27: #{tpu_custom_call.1} parent=1 // pred_check_branch
      %112 = sbr.rel (0) target = $region29
    $region28: #{tpu_custom_call.1} parent=1 // pred_region
      %113 = dma.done [#allocation4], 128
    $region29: #{tpu_custom_call.1} parent=1 // pred_fallthru
      _
    %114 = vsyncpa [#allocation3], 1
    %115 = vsyncpa [#allocation6], 1
    %116 = vsyncpa [#allocation4], 1

</llo_original>
